<compile_context>
chip_gen: v7x
topology: tpu7x:2x2x1
jax: 0.10.0
libtpu: 0.0.40
codegen_flags: <defaults>
</compile_context>

<pallas_src>
import functools

import jax
import jax.numpy as jnp
from jax.experimental import pallas as pl
from jax.experimental.pallas import tpu as pltpu

_EPS = 1e-5  # AdaptiveInstanceNorm2d / F.batch_norm eps


# ----------------------------------------------------------------------------
# Kernel A: AdaIN (per-(batch, channel) affine instance-norm) + ReLU
# ----------------------------------------------------------------------------
def _adain_act_kernel(x_ref, g_ref, b_ref, o_ref, *, eps):
    """x_ref: (1, HW, C); g_ref/b_ref: (1, 1, C); o_ref: (1, HW, C)."""
    x = x_ref[0]                                               # (HW, C)
    m = jnp.mean(x, axis=0, keepdims=True)                     # (1, C)
    v = jnp.mean((x - m) * (x - m), axis=0, keepdims=True)     # biased var
    y = (x - m) * jax.lax.rsqrt(v + eps)
    y = g_ref[0] * y + b_ref[0]                                # per-(b, c) affine
    o_ref[0] = jnp.maximum(y, 0.0).astype(o_ref.dtype)         # ReLU


def _adain_act(x_flat, gamma, beta):
    """x_flat: (B, HW, C); gamma/beta: (B, C). Returns relu(adain(x))."""
    B, P, C = x_flat.shape
    kern = functools.partial(_adain_act_kernel, eps=_EPS)
    return pl.pallas_call(
        kern,
        out_shape=jax.ShapeDtypeStruct((B, P, C), jnp.float32),
        grid=(B,),
        in_specs=[
            pl.BlockSpec((1, P, C), lambda b: (b, 0, 0)),
            pl.BlockSpec((1, 1, C), lambda b: (b, 0, 0)),
            pl.BlockSpec((1, 1, C), lambda b: (b, 0, 0)),
        ],
        out_specs=pl.BlockSpec((1, P, C), lambda b: (b, 0, 0)),
        compiler_params=pltpu.CompilerParams(dimension_semantics=("parallel",)),
    )(x_flat, gamma[:, None, :], beta[:, None, :])


# ----------------------------------------------------------------------------
# Kernel B: conv1 -> AdaIN2 -> ReLU -> conv2  (+ shortcut), whole block in VMEM
# ----------------------------------------------------------------------------
def _shift_rows(y, d):
    """result[p] = y[p + d]; zero-filled outside [0, P). Static d."""
    if d == 0:
        return y
    P, C = y.shape
    pad = jnp.zeros((abs(d), C), y.dtype)
    if d > 0:
        return jnp.concatenate([y[d:, :], pad], axis=0)
    return jnp.concatenate([pad, y[:P + d, :]], axis=0)


def _resblock_main_kernel(af_ref, sf_ref, w1_ref, b1_ref, g2_ref, be2_ref,
                          w2_ref, b2_ref, *rest,
                          Hp, Wp, cin, hch, cout, learnable_sc, eps, n_int):
    """One batch element of a ResBlock (post pre-activation + upsample + pad).

    af_ref: (1, Hp*Wp, cin)  zero-padded, flattened relu(adain1(x)) [upsampled]
    sf_ref: (1, Hp*Wp, *)    zero-padded, flattened shortcut source
    w1/w2 : (9*cin, hch) / (9*hch, cout)   stacked (kh, kw, cin, cout)
    o_ref : (1, Hp*Wp, cout) full padded grid (border rows are garbage,
                             sliced away by the wrapper)
    """
    if learnable_sc:
        wsc_ref, bsc_ref, o_ref = rest
    else:
        (o_ref,) = rest

    P = Hp * Wp
    a = af_ref[0]                                              # (P, cin)

    # Interior mask of the padded grid, built in-kernel (no extra HBM input).
    pos = jax.lax.broadcasted_iota(jnp.int32, (P, 1), 0)
    row = pos // Wp
    col = pos - row * Wp
    interior = (row >= 1) & (row <= Hp - 2) & (col >= 1) & (col <= Wp - 2)
    mask = jnp.where(interior, 1.0, 0.0)                       # (P, 1) f32

    def conv3x3(x, w_ref, b_ref, c_in, c_out):
        # conv(pad=1) == sum over 9 offsets of row-shifted (x @ W[kh,kw]);
        # zero borders of x make interior outputs exact, borders are discarded.
        z = jnp.zeros((P, c_out), jnp.float32)
        idx = 0
        for dh in (-1, 0, 1):
            for dw in (-1, 0, 1):
                wblk = w_ref[idx * c_in:(idx + 1) * c_in, :]   # (c_in, c_out)
                y = jnp.dot(x, wblk, preferred_element_type=jnp.float32)
                z = z + _shift_rows(y, dh * Wp + dw)
                idx += 1
        return z + b_ref[...]

    # conv1
    z1 = conv3x3(a, w1_ref, b1_ref, cin, hch)                  # (P, hch)

    # AdaIN2 (stats over interior positions only) + ReLU; re-zero the border
    # so conv2 sees correct zero padding.
    m = jnp.sum(z1 * mask, axis=0, keepdims=True) / n_int
    v = jnp.sum(((z1 - m) * (z1 - m)) * mask, axis=0, keepdims=True) / n_int
    h = (z1 - m) * jax.lax.rsqrt(v + eps)
    h = g2_ref[0] * h + be2_ref[0]
    h = jnp.maximum(h, 0.0) * mask

    # conv2
    z2 = conv3x3(h, w2_ref, b2_ref, hch, cout)                 # (P, cout)

    # shortcut: learnable 1x1 conv or identity
    s = sf_ref[0]
    if learnable_sc:
        s = jnp.dot(s, wsc_ref[...], preferred_element_type=jnp.float32) + bsc_ref[...]

    o_ref[0] = (z2 + s).astype(o_ref.dtype)


def _resblock_main(af, sf, p, Hp, Wp, learnable_sc):
    B, Pp, cin = af.shape
    hch = p["w1"].shape[1]
    cout = p["w2"].shape[1]
    csc = sf.shape[2]
    n_int = float((Hp - 2) * (Wp - 2))

    inputs = [af, sf, p["w1"], p["b1"], p["g2"][:, None, :], p["be2"][:, None, :],
              p["w2"], p["b2"]]
    in_specs = [
        pl.BlockSpec((1, Pp, cin), lambda b: (b, 0, 0)),
        pl.BlockSpec((1, Pp, csc), lambda b: (b, 0, 0)),
        pl.BlockSpec((9 * cin, hch), lambda b: (0, 0)),
        pl.BlockSpec((1, hch), lambda b: (0, 0)),
        pl.BlockSpec((1, 1, hch), lambda b: (b, 0, 0)),
        pl.BlockSpec((1, 1, hch), lambda b: (b, 0, 0)),
        pl.BlockSpec((9 * hch, cout), lambda b: (0, 0)),
        pl.BlockSpec((1, cout), lambda b: (0, 0)),
    ]
    if learnable_sc:
        inputs += [p["wsc"], p["bsc"]]
        in_specs += [pl.BlockSpec((cin, cout), lambda b: (0, 0)),
                     pl.BlockSpec((1, cout), lambda b: (0, 0))]

    kern = functools.partial(
        _resblock_main_kernel, Hp=Hp, Wp=Wp, cin=cin, hch=hch, cout=cout,
        learnable_sc=learnable_sc, eps=_EPS, n_int=n_int)

    return pl.pallas_call(
        kern,
        out_shape=jax.ShapeDtypeStruct((B, Pp, cout), jnp.float32),
        grid=(B,),
        in_specs=in_specs,
        out_specs=pl.BlockSpec((1, Pp, cout), lambda b: (b, 0, 0)),
        compiler_params=pltpu.CompilerParams(dimension_semantics=("parallel",)),
    )(*inputs)


# ----------------------------------------------------------------------------
# ResBlock_AdaIn_upsample forward (NHWC)
# ----------------------------------------------------------------------------
def res_block_forward(x, p):
    B, H, W, cin = x.shape
    upsample, learnable_sc = p["upsample"], p["learnable_sc"]

    # pre-activation: AdaIN(b1) + ReLU  (fused kernel A)
    a = _adain_act(x.reshape(B, H * W, cin), p["g1"], p["be1"]).reshape(B, H, W, cin)

    if upsample:                                   # nearest 2x (cheap XLA glue)
        a = jnp.repeat(jnp.repeat(a, 2, axis=1), 2, axis=2)
        s = jnp.repeat(jnp.repeat(x, 2, axis=1), 2, axis=2)
    else:
        s = x
    Ho, Wo = a.shape[1], a.shape[2]
    Hp, Wp = Ho + 2, Wo + 2

    a_pad = jnp.pad(a, ((0, 0), (1, 1), (1, 1), (0, 0)))        # zero pad (Conv2d default)
    s_pad = jnp.pad(s, ((0, 0), (1, 1), (1, 1), (0, 0)))
    af = a_pad.reshape(B, Hp * Wp, cin)
    sf = s_pad.reshape(B, Hp * Wp, s.shape[3])

    out = _resblock_main(af, sf, p, Hp, Wp, learnable_sc)       # fused kernel B
    cout = p["w2"].shape[1]
    return out.reshape(B, Hp, Wp, cout)[:, 1:Ho + 1, 1:Wo + 1, :]


# ----------------------------------------------------------------------------
# Com_S_C forward + synthetic parameters
# ----------------------------------------------------------------------------
def com_s_c(x_nchw, params):
    x = jnp.transpose(x_nchw, (0, 2, 3, 1)).astype(jnp.float32)   # -> NHWC
    for name in ("res1", "res3", "res4"):
        x = res_block_forward(x, params[name])
    return jnp.transpose(x, (0, 3, 1, 2))                         # -> NCHW


def init_params(key, c_dim, dim, batch):
    """Synthetic parameters matching Com_S_C(c_dim, dim) shapes.

    Conv weights are stored pre-reshaped as (kh, kw, cin, cout) flattened to
    (9*cin, cout); to port torch weights (cout, cin, kh, kw) use
    w.permute(2, 3, 1, 0).reshape(9*cin, cout) (after spectral normalization).
    """
    blocks = [
        ("res1", c_dim, 2 * dim, 2 * dim, True, True),
        ("res3", 2 * dim, dim, dim, True, True),
        ("res4", dim, dim, dim, False, False),
    ]
    params = {}
    for name, cin, hch, cout, ups, lsc in blocks:
        key, *ks = jax.random.split(key, 11)
        p = dict(upsample=ups, learnable_sc=lsc)
        p["g1"] = 1.0 + 0.1 * jax.random.normal(ks[0], (batch, cin), jnp.float32)
        p["be1"] = 0.1 * jax.random.normal(ks[1], (batch, cin), jnp.float32)
        p["g2"] = 1.0 + 0.1 * jax.random.normal(ks[2], (batch, hch), jnp.float32)
        p["be2"] = 0.1 * jax.random.normal(ks[3], (batch, hch), jnp.float32)
        p["w1"] = jax.random.normal(ks[4], (9 * cin, hch), jnp.float32) / jnp.sqrt(9.0 * cin)
        p["b1"] = 0.01 * jax.random.normal(ks[5], (1, hch), jnp.float32)
        p["w2"] = jax.random.normal(ks[6], (9 * hch, cout), jnp.float32) / jnp.sqrt(9.0 * hch)
        p["b2"] = 0.01 * jax.random.normal(ks[7], (1, cout), jnp.float32)
        if lsc:
            p["wsc"] = jax.random.normal(ks[8], (cin, cout), jnp.float32) / jnp.sqrt(1.0 * cin)
            p["bsc"] = 0.01 * jax.random.normal(ks[9], (1, cout), jnp.float32)
        params[name] = p
    return params


if __name__ == "__main__":
    C_DIM, DIM = 32, 8          # small config (reference defaults: 512, 128)
    B, H, W = 2, 8, 8

    key = jax.random.PRNGKey(0)
    kx, kp = jax.random.split(key)
    x = jax.random.normal(kx, (B, C_DIM, H, W), jnp.float32)      # NCHW input
    params = init_params(kp, C_DIM, DIM, B)

    y = com_s_c(x, params)
    y = jax.block_until_ready(y)

    expected = (B, DIM, 4 * H, 4 * W)                             # two 2x upsamples
    assert y.shape == expected, (y.shape, expected)
    assert bool(jnp.all(jnp.isfinite(y)))
    print("KERNEL_OK")
</pallas_src>

<mosaic_0001>
module attributes {stable_mosaic.version = 11 : i64} {
  func.func @_adain_act_kernel(%arg0: i32, %arg1: memref<1x64x32xf32, #tpu.memory_space<vmem>>, %arg2: memref<1x1x32xf32, #tpu.memory_space<vmem>>, %arg3: memref<1x1x32xf32, #tpu.memory_space<vmem>>, %arg4: memref<1x64x32xf32, #tpu.memory_space<vmem>>) attributes {dimension_semantics = [#tpu.dimension_semantics<parallel>], iteration_bounds = array<i64: 2>, scalar_prefetch = 0 : i64, scratch_operands = 0 : i64, tpu.core_type = #tpu.core_type<tc>, window_params = [{transform_indices = @transform_0, window_bounds = array<i64: 1, 64, 32>}, {transform_indices = @transform_1, window_bounds = array<i64: 1, 1, 32>}, {transform_indices = @transform_2, window_bounds = array<i64: 1, 1, 32>}, {transform_indices = @transform_3, window_bounds = array<i64: 1, 64, 32>}]} {
    %c0 = arith.constant 0 : index
    %c0_0 = arith.constant 0 : index
    %c0_1 = arith.constant 0 : index
    %0 = vector.load %arg1[%c0, %c0_0, %c0_1] : memref<1x64x32xf32, #tpu.memory_space<vmem>>, vector<1x64x32xf32>
    %1 = vector.shape_cast %0 : vector<1x64x32xf32> to vector<64x32xf32>
    %cst = arith.constant dense<0.000000e+00> : vector<32xf32>
    %2 = vector.multi_reduction <add>, %1, %cst [0] : vector<64x32xf32> to vector<32xf32>
    %3 = vector.shape_cast %2 : vector<32xf32> to vector<1x32xf32>
    %cst_2 = arith.constant 6.400000e+01 : f32
    %4 = vector.broadcast %cst_2 : f32 to vector<1x32xf32>
    %5 = arith.divf %3, %4 : vector<1x32xf32>
    %6 = vector.broadcast %5 : vector<1x32xf32> to vector<64x32xf32>
    %7 = arith.subf %1, %6 : vector<64x32xf32>
    %8 = vector.broadcast %5 : vector<1x32xf32> to vector<64x32xf32>
    %9 = arith.subf %1, %8 : vector<64x32xf32>
    %10 = arith.mulf %7, %9 : vector<64x32xf32>
    %cst_3 = arith.constant dense<0.000000e+00> : vector<32xf32>
    %11 = vector.multi_reduction <add>, %10, %cst_3 [0] : vector<64x32xf32> to vector<32xf32>
    %12 = vector.shape_cast %11 : vector<32xf32> to vector<1x32xf32>
    %cst_4 = arith.constant 6.400000e+01 : f32
    %13 = vector.broadcast %cst_4 : f32 to vector<1x32xf32>
    %14 = arith.divf %12, %13 : vector<1x32xf32>
    %15 = vector.broadcast %5 : vector<1x32xf32> to vector<64x32xf32>
    %16 = arith.subf %1, %15 : vector<64x32xf32>
    %cst_5 = arith.constant 9.99999974E-6 : f32
    %17 = vector.broadcast %cst_5 : f32 to vector<1x32xf32>
    %18 = arith.addf %14, %17 : vector<1x32xf32>
    %19 = math.rsqrt %18 : vector<1x32xf32>
    %20 = vector.broadcast %19 : vector<1x32xf32> to vector<64x32xf32>
    %21 = arith.mulf %16, %20 : vector<64x32xf32>
    %c0_6 = arith.constant 0 : index
    %c0_7 = arith.constant 0 : index
    %c0_8 = arith.constant 0 : index
    %22 = vector.load %arg2[%c0_6, %c0_7, %c0_8] : memref<1x1x32xf32, #tpu.memory_space<vmem>>, vector<1x1x32xf32>
    %23 = vector.shape_cast %22 : vector<1x1x32xf32> to vector<1x32xf32>
    %24 = vector.broadcast %23 : vector<1x32xf32> to vector<64x32xf32>
    %25 = arith.mulf %24, %21 : vector<64x32xf32>
    %c0_9 = arith.constant 0 : index
    %c0_10 = arith.constant 0 : index
    %c0_11 = arith.constant 0 : index
    %26 = vector.load %arg3[%c0_9, %c0_10, %c0_11] : memref<1x1x32xf32, #tpu.memory_space<vmem>>, vector<1x1x32xf32>
    %27 = vector.shape_cast %26 : vector<1x1x32xf32> to vector<1x32xf32>
    %28 = vector.broadcast %27 : vector<1x32xf32> to vector<64x32xf32>
    %29 = arith.addf %25, %28 : vector<64x32xf32>
    %cst_12 = arith.constant 0.000000e+00 : f32
    %30 = vector.broadcast %cst_12 : f32 to vector<64x32xf32>
    %31 = arith.maximumf %29, %30 : vector<64x32xf32>
    %c0_13 = arith.constant 0 : index
    %c0_14 = arith.constant 0 : index
    %c0_15 = arith.constant 0 : index
    %32 = vector.load %arg4[%c0_13, %c0_14, %c0_15] : memref<1x64x32xf32, #tpu.memory_space<vmem>>, vector<1x64x32xf32>
    %33 = vector.shape_cast %32 : vector<1x64x32xf32> to vector<64x32xf32>
    %34 = vector.shape_cast %31 : vector<64x32xf32> to vector<1x64x32xf32>
    tpu.vector_store %arg4[%c0_13, %c0_14, %c0_15], %34 {strides = array<i32>} : memref<1x64x32xf32, #tpu.memory_space<vmem>>, vector<1x64x32xf32>,
    return
  }
  func.func @transform_0(%arg0: i32) -> (i32, i32, i32) {
    %c0_i32 = arith.constant 0 : i32
    %c0_i32_0 = arith.constant 0 : i32
    %c0_i32_1 = arith.constant 0 : i32
    return %arg0, %c0_i32, %c0_i32_0 : i32, i32, i32
  }
  func.func @transform_1(%arg0: i32) -> (i32, i32, i32) {
    %c0_i32 = arith.constant 0 : i32
    %c0_i32_0 = arith.constant 0 : i32
    %c0_i32_1 = arith.constant 0 : i32
    return %arg0, %c0_i32, %c0_i32_0 : i32, i32, i32
  }
  func.func @transform_2(%arg0: i32) -> (i32, i32, i32) {
    %c0_i32 = arith.constant 0 : i32
    %c0_i32_0 = arith.constant 0 : i32
    %c0_i32_1 = arith.constant 0 : i32
    return %arg0, %c0_i32, %c0_i32_0 : i32, i32, i32
  }
  func.func @transform_3(%arg0: i32) -> (i32, i32, i32) {
    %c0_i32 = arith.constant 0 : i32
    %c0_i32_0 = arith.constant 0 : i32
    %c0_i32_1 = arith.constant 0 : i32
    return %arg0, %c0_i32, %c0_i32_0 : i32, i32, i32
  }
}

</mosaic_0001>

<llo_original>
// kernel: tpu_custom_call.1
$region0: #{tpu_custom_call.1}
  #allocation0 [shape = 'u32[]', space=smem, size = 0x4, offset = 0x4, fixed_abs, tag = 'smem constant byte address 0x4 - core index']
  #allocation1 [shape = 'u32[144,128]{1,0:T(1,128)}', space=vmem, size = 0x12000, scoped, tag = 'internal scratch']
  %s0 = inlined_call_operand.vmem [shape: f32[2,64,32], index: 0, kind: input, shape index: {}]
  %s1 = inlined_call_operand.vmem [shape: f32[2,1,32], index: 1, kind: input, shape index: {}]
  %s2 = inlined_call_operand.vmem [shape: f32[2,1,32], index: 2, kind: input, shape index: {}]
  %s3 = inlined_call_operand.vmem [shape: f32[2,64,32], index: 3, kind: output, shape index: {}]
  %s4 = sld [smem:[#allocation0]]
  $region45: #{tpu_custom_call.1} parent=0
    _
  %s6 = ssub.s32 1, %s4
  %s7 = scalar_select 0, %s6, %s4
  loop: start=0, step=1, limit=4
  $region2: #{tpu_custom_call.1} parent=0 // loop_pre_header
    _
  $region3: #{tpu_custom_call.1} parent=0 // loop_header
    %s9 = sphi 0, %s13
    %p10 = scmp.ge.s32.totalorder %s9, 4
    %s19 = sphi 0, %s21
    %s22 = sphi 0, %s19
    %s23 = sphi 0, %s22
    %s39 = sphi 0, %s23
    %s45 = sphi 0, %s47
    %s48 = sphi 0, %s45
    %s49 = sphi 0, %s48
    %s65 = sphi 0, %s49
    %s71 = sphi 0, %s73
    %s74 = sphi 0, %s71
    %s75 = sphi 0, %s74
    %s91 = sphi 0, %s75
    %s97 = sphi 0, %s99
    %s100 = sphi 0, %s97
    %s101 = sphi 0, %s100
    %s117 = sphi 0, %s101
  $region4: #{tpu_custom_call.1} parent=0 // loop_header_branch
    %12 = sbr.rel (%p10) target = $region8
  $region5: #{tpu_custom_call.1} parent=0 // loop_body
    %s14 = ssub.s32 %s9, 1
    %s15 = ssub.s32 %s9, 2
    %s16 = sadd.s32 %s9, 1
    %s17 = ssub.s32 %s9, %s16
    %p18 = scmp.eq.s32.totalorder %s17, 0
    %s20 = sadd.s32 %s19, 1
    %s21 = scalar_select %p18, %s19, %s20
    %p24 = pneg %p18
    %p25 = scmp.eq.s32.totalorder %s9, 1
    %p26 = por %p24, %p25
    %p27 = scmp.ne.s32.totalorder %s19, %s22
    %p28 = scmp.eq.s32.totalorder %s9, 0
    %p29 = por %p27, %p28
    %p30 = scmp.ne.s32.totalorder %s19, %s22
    %p31 = scmp.eq.s32.totalorder %s14, 1
    %p32 = por %p30, %p31
    %p33 = scmp.ne.s32.totalorder %s22, %s23
    %p34 = scmp.eq.s32.totalorder %s14, 0
    %p35 = por %p33, %p34
    %p36 = scmp.ne.s32.totalorder %s22, %s23
    %p37 = scmp.eq.s32.totalorder %s15, 1
    %p38 = por %p36, %p37
    %p40 = scmp.ne.s32.totalorder %s23, %s39
    %p41 = scmp.eq.s32.totalorder %s15, 0
    %p42 = por %p40, %p41
    %s43 = ssub.s32 %s9, %s16
    %p44 = scmp.eq.s32.totalorder %s43, 0
    %s46 = sadd.s32 %s45, 1
    %s47 = scalar_select %p44, %s45, %s46
    %p50 = pneg %p44
    %p51 = scmp.eq.s32.totalorder %s9, 1
    %p52 = por %p50, %p51
    %p53 = scmp.ne.s32.totalorder %s45, %s48
    %p54 = scmp.eq.s32.totalorder %s9, 0
    %p55 = por %p53, %p54
    %p56 = scmp.ne.s32.totalorder %s45, %s48
    %p57 = scmp.eq.s32.totalorder %s14, 1
    %p58 = por %p56, %p57
    %p59 = scmp.ne.s32.totalorder %s48, %s49
    %p60 = scmp.eq.s32.totalorder %s14, 0
    %p61 = por %p59, %p60
    %p62 = scmp.ne.s32.totalorder %s48, %s49
    %p63 = scmp.eq.s32.totalorder %s15, 1
    %p64 = por %p62, %p63
    %p66 = scmp.ne.s32.totalorder %s49, %s65
    %p67 = scmp.eq.s32.totalorder %s15, 0
    %p68 = por %p66, %p67
    %s69 = ssub.s32 %s9, %s16
    %p70 = scmp.eq.s32.totalorder %s69, 0
    %s72 = sadd.s32 %s71, 1
    %s73 = scalar_select %p70, %s71, %s72
    %p76 = pneg %p70
    %p77 = scmp.eq.s32.totalorder %s9, 1
    %p78 = por %p76, %p77
    %p79 = scmp.ne.s32.totalorder %s71, %s74
    %p80 = scmp.eq.s32.totalorder %s9, 0
    %p81 = por %p79, %p80
    %p82 = scmp.ne.s32.totalorder %s71, %s74
    %p83 = scmp.eq.s32.totalorder %s14, 1
    %p84 = por %p82, %p83
    %p85 = scmp.ne.s32.totalorder %s74, %s75
    %p86 = scmp.eq.s32.totalorder %s14, 0
    %p87 = por %p85, %p86
    %p88 = scmp.ne.s32.totalorder %s74, %s75
    %p89 = scmp.eq.s32.totalorder %s15, 1
    %p90 = por %p88, %p89
    %p92 = scmp.ne.s32.totalorder %s75, %s91
    %p93 = scmp.eq.s32.totalorder %s15, 0
    %p94 = por %p92, %p93
    %s95 = ssub.s32 %s9, %s16
    %p96 = scmp.eq.s32.totalorder %s95, 0
    %s98 = sadd.s32 %s97, 1
    %s99 = scalar_select %p96, %s97, %s98
    %p102 = pneg %p96
    %p103 = scmp.eq.s32.totalorder %s9, 1
    %p104 = por %p102, %p103
    %p105 = scmp.ne.s32.totalorder %s97, %s100
    %p106 = scmp.eq.s32.totalorder %s9, 0
    %p107 = por %p105, %p106
    %p108 = scmp.ne.s32.totalorder %s97, %s100
    %p109 = scmp.eq.s32.totalorder %s14, 1
    %p110 = por %p108, %p109
    %p111 = scmp.ne.s32.totalorder %s100, %s101
    %p112 = scmp.eq.s32.totalorder %s14, 0
    %p113 = por %p111, %p112
    %p114 = scmp.ne.s32.totalorder %s100, %s101
    %p115 = scmp.eq.s32.totalorder %s15, 1
    %p116 = por %p114, %p115
    %p118 = scmp.ne.s32.totalorder %s101, %s117
    %p119 = scmp.eq.s32.totalorder %s15, 0
    %p120 = por %p118, %p119
    %p121 = scmp.le.s32.totalorder 1, %s9
    %p122 = scmp.lt.s32.totalorder %s9, 3
    %p123 = pnand %p121, %p122
    %p124 = pneg %p123
    // Predicated region
    $region9: #{tpu_custom_call.1} parent=5 // pred_check
      _
    $region10: #{tpu_custom_call.1} parent=5 // pred_check_branch
      %126 = sbr.rel (%p123) target = $region12
    $region11: #{tpu_custom_call.1} parent=5 // pred_region
      %s127 = ssub.s32 %s9, 1
    $region12: #{tpu_custom_call.1} parent=5 // pred_fallthru
      _
    %p128 = scmp.lt.s32.totalorder %s9, 2
    // Predicated region
    $region13: #{tpu_custom_call.1} parent=5 // pred_check
      %p129 = pneg %p128
    $region14: #{tpu_custom_call.1} parent=5 // pred_check_branch
      %131 = sbr.rel (%p129) target = $region16
    $region15: #{tpu_custom_call.1} parent=5 // pred_region
      // Predicated region
      $region17: #{tpu_custom_call.1} parent=15 // pred_check
        %p132 = pneg %p29
      $region18: #{tpu_custom_call.1} parent=15 // pred_check_branch
        %134 = sbr.rel (%p132) target = $region20
      $region19: #{tpu_custom_call.1} parent=15 // pred_region
        %p135 = scmp.lt.s32.totalorder %s9, 1
        %s136 = scalar_select %p135, %s9, 1
        %s137 = smul.addr %s136, 8
        %s138 = smul.addr %s137, 8
        %s139 = scalar_lea.vmem %s0, %s138
      $region20: #{tpu_custom_call.1} parent=15 // pred_fallthru
        _
      // Predicated region
      $region21: #{tpu_custom_call.1} parent=15 // pred_check
        %p140 = pneg %p55
      $region22: #{tpu_custom_call.1} parent=15 // pred_check_branch
        %142 = sbr.rel (%p140) target = $region24
      $region23: #{tpu_custom_call.1} parent=15 // pred_region
        %p143 = scmp.lt.s32.totalorder %s9, 1
        %s144 = scalar_select %p143, %s9, 1
        %s145 = scalar_lea.vmem %s1, %s144
      $region24: #{tpu_custom_call.1} parent=15 // pred_fallthru
        _
      // Predicated region
      $region25: #{tpu_custom_call.1} parent=15 // pred_check
        %p146 = pneg %p81
      $region26: #{tpu_custom_call.1} parent=15 // pred_check_branch
        %148 = sbr.rel (%p146) target = $region28
      $region27: #{tpu_custom_call.1} parent=15 // pred_region
        %p149 = scmp.lt.s32.totalorder %s9, 1
        %s150 = scalar_select %p149, %s9, 1
        %s151 = scalar_lea.vmem %s2, %s150
      $region28: #{tpu_custom_call.1} parent=15 // pred_fallthru
        _
    $region16: #{tpu_custom_call.1} parent=5 // pred_fallthru
      _
    %p152 = scmp.le.s32.totalorder 1, %s9
    %p153 = scmp.lt.s32.totalorder %s9, 3
    %p154 = pnand %p152, %p153
    %p155 = pneg %p154
    // Predicated region
    $region29: #{tpu_custom_call.1} parent=5 // pred_check
      _
    $region30: #{tpu_custom_call.1} parent=5 // pred_check_branch
      %157 = sbr.rel (%p154) target = $region32
    $region31: #{tpu_custom_call.1} parent=5 // pred_region
      %s158 = ssub.s32 %s9, 1
      %p159 = scmp.lt.s32.totalorder %s14, 1
      %s160 = scalar_select %p159, %s14, 1
      %s161 = smul.addr %s160, 8
      %s162 = smul.addr %s161, 8
      %s163 = scalar_lea.vmem %s0, %s162
      %p164 = pneg %p35
      %p165 = pneg %p32
      %p166 = scmp.lt.s32.totalorder %s14, 1
      %s167 = scalar_select %p166, %s14, 1
      %s168 = scalar_lea.vmem %s1, %s167
      %p169 = pneg %p61
      %p170 = pneg %p58
      %p171 = scmp.lt.s32.totalorder %s14, 1
      %s172 = scalar_select %p171, %s14, 1
      %s173 = scalar_lea.vmem %s2, %s172
      %p174 = pneg %p87
      %p175 = pneg %p84
      %p176 = pneg %p113
      %p177 = pneg %p110
      %p178 = scmp.lt.s32.totalorder %s14, 1
      %s179 = scalar_select %p178, %s14, 1
      %s180 = smul.addr %s179, 8
      %s181 = smul.addr %s180, 8
      %s182 = scalar_lea.vmem %s3, %s181
      %p183 = scmp.lt.s32.totalorder %s14, 1
      %s184 = scalar_select %p183, %s14, 1
      %s185 = smul.addr %s184, 8
      %s186 = smul.addr %s185, 8
      %s187 = scalar_lea.vmem %s0, %s186
      %p188 = scmp.lt.s32.totalorder %s14, 1
      %s189 = scalar_select %p188, %s14, 1
      %s190 = scalar_lea.vmem %s1, %s189
      %p191 = scmp.lt.s32.totalorder %s14, 1
      %s192 = scalar_select %p191, %s14, 1
      %s193 = scalar_lea.vmem %s2, %s192
      %p194 = scmp.lt.s32.totalorder %s14, 1
      %s195 = scalar_select %p194, %s14, 1
      %s196 = smul.addr %s195, 8
      %s197 = smul.addr %s196, 8
      %s198 = scalar_lea.vmem %s3, %s197
      %v199 = vld [vmem:[%s187] sm:$0xff]
      %v200 = vld [vmem:[%s187 + $0x8] sm:$0xff]
      %v201 = vld [vmem:[%s187 + $0x10] sm:$0xff]
      %v202 = vld [vmem:[%s187 + $0x18] sm:$0xff]
      %v203 = vld [vmem:[%s187 + $0x20] sm:$0xff]
      %v204 = vld [vmem:[%s187 + $0x28] sm:$0xff]
      %v205 = vld [vmem:[%s187 + $0x30] sm:$0xff]
      %v206 = vld [vmem:[%s187 + $0x38] sm:$0xff]
      %vm207 = vcmask 261120
      %v208 = vsel %vm207, %v199, 0.0
      %v209 = vsel %vm207, %v200, 0.0
      %v210 = vadd.f32 %v208, %v209
      %v211 = vsel %vm207, %v201, 0.0
      %v212 = vadd.f32 %v210, %v211
      %v213 = vsel %vm207, %v202, 0.0
      %v214 = vadd.f32 %v212, %v213
      %v215 = vsel %vm207, %v203, 0.0
      %v216 = vadd.f32 %v214, %v215
      %v217 = vsel %vm207, %v204, 0.0
      %v218 = vadd.f32 %v216, %v217
      %v219 = vsel %vm207, %v205, 0.0
      %v220 = vadd.f32 %v218, %v219
      %v221 = vsel %vm207, %v206, 0.0
      %v222 = vadd.f32 %v220, %v221
      %v223 = vrot.slane %v222, 4
      %v224 = vadd.f32 %v222, %v223
      %v225 = vrot.slane %v224, 2
      %v226 = vadd.f32 %v224, %v225
      %v227 = vrot.slane %v226, 1
      %v228 = vadd.f32 %v226, %v227
      %v229 = vrcp.pop 64.0
      %v230 = vmul.f32 %v228, %v229
      %v231 = vsub.f32 %v199, %v230
      %v232 = vsub.f32 %v200, %v230
      %v233 = vsub.f32 %v201, %v230
      %v234 = vsub.f32 %v202, %v230
      %v235 = vsub.f32 %v203, %v230
      %v236 = vsub.f32 %v204, %v230
      %v237 = vsub.f32 %v205, %v230
      %v238 = vsub.f32 %v206, %v230
      %v239 = vmul.f32 %v231, %v231
      %v240 = vmul.f32 %v232, %v232
      %v241 = vmul.f32 %v233, %v233
      %v242 = vmul.f32 %v234, %v234
      %v243 = vmul.f32 %v235, %v235
      %v244 = vmul.f32 %v236, %v236
      %v245 = vmul.f32 %v237, %v237
      %v246 = vmul.f32 %v238, %v238
      %v247 = vsel %vm207, %v239, 0.0
      %v248 = vsel %vm207, %v240, 0.0
      %v249 = vadd.f32 %v247, %v248
      %v250 = vsel %vm207, %v241, 0.0
      %v251 = vadd.f32 %v249, %v250
      %v252 = vsel %vm207, %v242, 0.0
      %v253 = vadd.f32 %v251, %v252
      %v254 = vsel %vm207, %v243, 0.0
      %v255 = vadd.f32 %v253, %v254
      %v256 = vsel %vm207, %v244, 0.0
      %v257 = vadd.f32 %v255, %v256
      %v258 = vsel %vm207, %v245, 0.0
      %v259 = vadd.f32 %v257, %v258
      %v260 = vsel %vm207, %v246, 0.0
      %v261 = vadd.f32 %v259, %v260
      %v262 = vrot.slane %v261, 4
      %v263 = vadd.f32 %v261, %v262
      %v264 = vrot.slane %v263, 2
      %v265 = vadd.f32 %v263, %v264
      %v266 = vrot.slane %v265, 1
      %v267 = vadd.f32 %v265, %v266
      %v268 = vmul.f32 %v267, %v229
      %v269 = vadd.f32 %v268, 1e-05
      %v270 = vrsqrt.pop %v269
      %v271 = vmul.f32 %v231, %v270
      %v272 = vmul.f32 %v232, %v270
      %v273 = vmul.f32 %v233, %v270
      %v274 = vmul.f32 %v234, %v270
      %v275 = vmul.f32 %v235, %v270
      %v276 = vmul.f32 %v236, %v270
      %v277 = vmul.f32 %v237, %v270
      %v278 = vmul.f32 %v238, %v270
      %v279 = vld [vmem:[%s190] sm:$0x1]
      %v281 = vlaneseq
      %v282 = vshrl.u32 %v281, 7
      %v283 = vsub.s32 0, %v282
      %v284 = vrot.slane %v279, %v283
      %v286 = vmul.f32 %v284, %v271
      %v287 = vmul.f32 %v284, %v272
      %v288 = vmul.f32 %v284, %v273
      %v289 = vmul.f32 %v284, %v274
      %v290 = vmul.f32 %v284, %v275
      %v291 = vmul.f32 %v284, %v276
      %v292 = vmul.f32 %v284, %v277
      %v293 = vmul.f32 %v284, %v278
      %v294 = vld [vmem:[%s193] sm:$0x1]
      %v296 = vlaneseq
      %v297 = vshrl.u32 %v296, 7
      %v298 = vsub.s32 0, %v297
      %v299 = vrot.slane %v294, %v298
      %v301 = vadd.f32 %v286, %v299
      %v302 = vadd.f32 %v287, %v299
      %v303 = vadd.f32 %v288, %v299
      %v304 = vadd.f32 %v289, %v299
      %v305 = vadd.f32 %v290, %v299
      %v306 = vadd.f32 %v291, %v299
      %v307 = vadd.f32 %v292, %v299
      %v308 = vadd.f32 %v293, %v299
      %v309 = vmax.f32 %v301, 0.0
      %v310 = vmax.f32 %v302, 0.0
      %v311 = vmax.f32 %v303, 0.0
      %v312 = vmax.f32 %v304, 0.0
      %v313 = vmax.f32 %v305, 0.0
      %v314 = vmax.f32 %v306, 0.0
      %v315 = vmax.f32 %v307, 0.0
      %v316 = vmax.f32 %v308, 0.0
      %317 = vst.msk [vmem:[%s198] sm:$0xff] %vm207, %v309
      %318 = vst.msk [vmem:[%s198 + $0x8] sm:$0xff] %vm207, %v310
      %319 = vst.msk [vmem:[%s198 + $0x10] sm:$0xff] %vm207, %v311
      %320 = vst.msk [vmem:[%s198 + $0x18] sm:$0xff] %vm207, %v312
      %321 = vst.msk [vmem:[%s198 + $0x20] sm:$0xff] %vm207, %v313
      %322 = vst.msk [vmem:[%s198 + $0x28] sm:$0xff] %vm207, %v314
      %323 = vst.msk [vmem:[%s198 + $0x30] sm:$0xff] %vm207, %v315
      %324 = vst.msk [vmem:[%s198 + $0x38] sm:$0xff] %vm207, %v316
      %p325 = scmp.lt.s32.totalorder %s14, 1
      %s326 = scalar_select %p325, %s14, 1
      %s327 = smul.addr %s326, 8
      %s328 = smul.addr %s327, 8
      %s329 = scalar_lea.vmem %s3, %s328
      // Predicated region
      $region33: #{tpu_custom_call.1} parent=31 // pred_check
        %p330 = pneg %p110
      $region34: #{tpu_custom_call.1} parent=31 // pred_check_branch
        %332 = sbr.rel (%p330) target = $region36
      $region35: #{tpu_custom_call.1} parent=31 // pred_region
        _
      $region36: #{tpu_custom_call.1} parent=31 // pred_fallthru
        _
    $region32: #{tpu_custom_call.1} parent=5 // pred_fallthru
      _
    %p333 = scmp.le.s32.totalorder 2, %s9
    // Predicated region
    $region37: #{tpu_custom_call.1} parent=5 // pred_check
      %p334 = pneg %p333
    $region38: #{tpu_custom_call.1} parent=5 // pred_check_branch
      %336 = sbr.rel (%p334) target = $region40
    $region39: #{tpu_custom_call.1} parent=5 // pred_region
      %s337 = ssub.s32 %s9, 2
      // Predicated region
      $region41: #{tpu_custom_call.1} parent=39 // pred_check
        %p338 = pneg %p116
      $region42: #{tpu_custom_call.1} parent=39 // pred_check_branch
        %340 = sbr.rel (%p338) target = $region44
      $region43: #{tpu_custom_call.1} parent=39 // pred_region
        %p341 = scmp.lt.s32.totalorder %s15, 1
        %s342 = scalar_select %p341, %s15, 1
        %s343 = smul.addr %s342, 8
        %s344 = smul.addr %s343, 8
        %s345 = scalar_lea.vmem %s3, %s344
      $region44: #{tpu_custom_call.1} parent=39 // pred_fallthru
        _
    $region40: #{tpu_custom_call.1} parent=5 // pred_fallthru
      _
  $region6: #{tpu_custom_call.1} parent=0 // loop_footer
    %s13 = sadd.s32 1, %s9
  $region7: #{tpu_custom_call.1} parent=0 // loop_footer_branch
    %8 = sbr.rel target = $region3
  $region8: #{tpu_custom_call.1} parent=0 // loop_exit
    _

</llo_original>
